<compile_context>
chip_gen: v7x
topology: tpu7x:2x2x1
jax: 0.10.0
libtpu: 0.0.40
codegen_flags: <defaults>
</compile_context>

<pallas_src>
import functools

import jax
import jax.numpy as jnp
from jax import lax
from jax.experimental import pallas as pl
from jax.experimental.pallas import tpu as pltpu

_LN_EPS = 1e-5                       # PyTorch nn.LayerNorm default eps
_VMEM_LIMIT = 64 * 1024 * 1024       # explicit scoped-VMEM budget (ok on v5e/v6e/v7x)


def _silu(v):
    return v * jax.nn.sigmoid(v)


# ---------------------------------------------------------------------------
# Zero-filled shifts used to build the per-ky im2col columns in registers.
# TODO(synk): pltpu.roll + iota edge-mask would push these copies onto the idle
# XLU; kept as (proven-to-lower) concats since roll on a non-minor axis of a
# rank-4 value is not a verified lowering path.
# ---------------------------------------------------------------------------
def _shift_h(v, off):
    """out[:, i] = v[:, i + off], zero outside [0, H)."""
    NB, H, W, C = v.shape
    if off == 0:
        return v
    z = jnp.zeros((NB, abs(off), W, C), v.dtype)
    if off > 0:
        return jnp.concatenate([v[:, off:, :, :], z], axis=1)
    return jnp.concatenate([z, v[:, :H + off, :, :]], axis=1)


def _shift_w(v, off):
    """out[:, :, j] = v[:, :, j + off], zero outside [0, W)."""
    NB, H, W, C = v.shape
    if off == 0:
        return v
    z = jnp.zeros((NB, H, abs(off), C), v.dtype)
    if off > 0:
        return jnp.concatenate([v[:, :, off:, :], z], axis=2)
    return jnp.concatenate([z, v[:, :, :W + off, :]], axis=2)


# ---------------------------------------------------------------------------
# Kernel 1: general spatial path (norm == 'none' / nn.Identity).
# One grid step = one batch tile.  Each 3x3 conv = three K=3C matmuls (one per
# kernel row ky) on bf16 operands with f32 accumulation.
# ---------------------------------------------------------------------------
def _res_conv_kernel(x_ref, w1_ref, w2_ref, vecs_ref, o_ref, *, H, W, C):
    NB = x_ref.shape[0]
    M = NB * H * W

    x = x_ref[...]                    # (NB, H, W, C) f32
    b1 = vecs_ref[0:1, :]             # (1, C) f32
    b2 = vecs_ref[1:2, :]

    def conv3x3(a, w_ref, b):
        # Tap order (ky, kx, ci) matches the HWIO -> (3, 3C, C) weight reshape:
        #   tap(ky, kx)[n, i, j, :] = a[n, i+ky-1, j+kx-1, :]   (zero outside).
        acc = None
        for ky in range(3):
            a_dy = _shift_h(a, ky - 1)
            col = jnp.concatenate(
                [_shift_w(a_dy, -1), a_dy, _shift_w(a_dy, 1)], axis=-1)
            col = col.reshape(M, 3 * C).astype(jnp.bfloat16)     # (M, 3C)
            part = jnp.dot(col, w_ref[ky],                        # (3C, C) bf16
                           preferred_element_type=jnp.float32)
            acc = part if acc is None else acc + part
        return acc + b                                            # (M, C) f32

    a1 = _silu(x)                                    # norm1 == Identity here
    y1 = conv3x3(a1, w1_ref, b1)
    a2 = _silu(y1).reshape(NB, H, W, C)              # norm2 == Identity here
    y2 = conv3x3(a2, w2_ref, b2)
    o_ref[...] = y2.reshape(NB, H, W, C) + x         # residual add
    # TODO(synk): for C < 128 a packed (NB, H, W*C) output layout would make the
    # stores fully lane-dense; needs a minor-dim relayout reshape in-kernel.


# ---------------------------------------------------------------------------
# Kernel 2: (N, C, 1, 1) path (required by nn.LayerNorm([C,1,1]); also valid
# for norm='none').  A 3x3 SAME conv on 1x1 spatial reduces to its center tap,
# i.e. a single (rows, C) @ (C, C) matmul per conv.
# ---------------------------------------------------------------------------
def _res_1x1_kernel(x_ref, w1_ref, w2_ref, vecs_ref, o_ref, *, use_layernorm):
    x = x_ref[...]                    # (NBR, C) f32
    b1 = vecs_ref[0:1, :]
    b2 = vecs_ref[1:2, :]
    g1 = vecs_ref[2:3, :]
    be1 = vecs_ref[3:4, :]
    g2 = vecs_ref[4:5, :]
    be2 = vecs_ref[5:6, :]

    def layer_norm(v, g, be):
        # nn.LayerNorm([C,1,1]) on (N,C,1,1): stats over channels per sample.
        mu = jnp.mean(v, axis=-1, keepdims=True)
        var = jnp.mean((v - mu) ** 2, axis=-1, keepdims=True)
        return (v - mu) * lax.rsqrt(var + _LN_EPS) * g + be

    def dense(v, w_ref, b):
        return jnp.dot(v.astype(jnp.bfloat16), w_ref[...],
                       preferred_element_type=jnp.float32) + b

    h1 = layer_norm(x, g1, be1) if use_layernorm else x
    y1 = dense(_silu(h1), w1_ref, b1)
    h2 = layer_norm(y1, g2, be2) if use_layernorm else y1
    y2 = dense(_silu(h2), w2_ref, b2)
    o_ref[...] = y2 + x


# ---------------------------------------------------------------------------
# Wrapper
# ---------------------------------------------------------------------------
def _pack_vecs(params, C):
    """Pack the six (C,) parameter vectors into one (8, C) block."""
    zeros = jnp.zeros((C,), jnp.float32)
    ones = jnp.ones((C,), jnp.float32)

    def get(name, default):
        v = params.get(name)
        return default if v is None else jnp.asarray(v, jnp.float32).reshape(C)

    rows = [get('b1', zeros), get('b2', zeros),
            get('g1', ones), get('be1', zeros),
            get('g2', ones), get('be2', zeros),
            zeros, zeros]                            # pad to 8 sublanes
    return jnp.stack(rows, axis=0)                   # (8, C)


def residual_block_pallas(x_nchw, params, norm='layer', batch_tile=None):
    """Pallas TPU ResidualBlock.forward (NCHW in / NCHW out, float32).

    batch_tile: samples per grid step on the spatial path (default 1, so the
    grid has N steps -> BlockSpec double-buffering overlaps the HBM traffic
    with the conv matmuls and both v7x TensorCores get work).
    """
    N, C, H, W = x_nchw.shape
    if norm == 'layer' and not (H == 1 and W == 1):
        raise ValueError("nn.LayerNorm([C, 1, 1]) only accepts (N, C, 1, 1) inputs")

    w1_hwio = jnp.transpose(jnp.asarray(params['w1'], jnp.float32), (2, 3, 1, 0))
    w2_hwio = jnp.transpose(jnp.asarray(params['w2'], jnp.float32), (2, 3, 1, 0))
    vecs = _pack_vecs(params, C)

    if H == 1 and W == 1:
        # Center-tap path: two small matmuls + elementwise, no conv machinery.
        x2 = x_nchw.astype(jnp.float32).reshape(N, C)
        w1c = w1_hwio[1, 1].astype(jnp.bfloat16)          # (C, C)
        w2c = w2_hwio[1, 1].astype(jnp.bfloat16)
        # Row-block over N so production batch sizes pipeline and the (C,C)
        # weights stay resident; fall back to one full block when N is ragged.
        NBR = 256 if N % 256 == 0 else N
        kernel = functools.partial(_res_1x1_kernel,
                                   use_layernorm=(norm == 'layer'))
        out2 = pl.pallas_call(
            kernel,
            out_shape=jax.ShapeDtypeStruct((N, C), jnp.float32),
            grid=(N // NBR,),
            in_specs=[
                pl.BlockSpec((NBR, C), lambda n: (n, 0)),
                pl.BlockSpec((C, C), lambda n: (0, 0)),
                pl.BlockSpec((C, C), lambda n: (0, 0)),
                pl.BlockSpec((8, C), lambda n: (0, 0)),
            ],
            out_specs=pl.BlockSpec((NBR, C), lambda n: (n, 0)),
            compiler_params=pltpu.CompilerParams(
                dimension_semantics=("parallel",),
                vmem_limit_bytes=_VMEM_LIMIT),
        )(x2, w1c, w2c, vecs)
        return out2.reshape(N, C, 1, 1)

    # General spatial path (norm == 'none').
    # TODO(synk): if the surrounding model can carry NHWC activations, drop
    # these two wrapper transposes (each is a full extra HBM read+write).
    x = jnp.transpose(x_nchw.astype(jnp.float32), (0, 2, 3, 1))   # NCHW -> NHWC
    # Weights as (3, 3C, C) bf16: one K=3C slab per kernel row ky.
    w1_k = w1_hwio.reshape(3, 3 * C, C).astype(jnp.bfloat16)
    w2_k = w2_hwio.reshape(3, 3 * C, C).astype(jnp.bfloat16)

    NB = 1 if batch_tile is None else batch_tile
    if N % NB != 0:
        raise ValueError("batch_tile must divide N")
    # Note: the matmul M per step is NB*H*W; choose NB (or an H-tile, see TODO)
    # so M is a multiple of 256 on v6e/v7x (128 on v5e) when possible.
    # TODO(synk): for large H*W*C on v7x (64 MiB VMEM) add an H-tile grid axis
    # with a 2-row halo; at these block sizes a whole sample fits comfortably.
    # TODO(synk): mark the weight/vecs specs pipeline_mode=pl.Buffered(1) once
    # single-buffered revisited blocks are verified to lower (saves 2x weight
    # VMEM at large C; irrelevant at demo size).
    kernel = functools.partial(_res_conv_kernel, H=H, W=W, C=C)
    out_nhwc = pl.pallas_call(
        kernel,
        out_shape=jax.ShapeDtypeStruct((N, H, W, C), jnp.float32),
        grid=(N // NB,),
        in_specs=[
            pl.BlockSpec((NB, H, W, C), lambda n: (n, 0, 0, 0)),
            pl.BlockSpec((3, 3 * C, C), lambda n: (0, 0, 0)),
            pl.BlockSpec((3, 3 * C, C), lambda n: (0, 0, 0)),
            pl.BlockSpec((8, C), lambda n: (0, 0)),
        ],
        out_specs=pl.BlockSpec((NB, H, W, C), lambda n: (n, 0, 0, 0)),
        compiler_params=pltpu.CompilerParams(
            dimension_semantics=("parallel",),
            vmem_limit_bytes=_VMEM_LIMIT),
    )(x, w1_k, w2_k, vecs)

    return jnp.transpose(out_nhwc, (0, 3, 1, 2))                  # NHWC -> NCHW


# ---------------------------------------------------------------------------
# Pure-JAX reference (f32 / HIGHEST precision ground truth) and demo params.
# ---------------------------------------------------------------------------
def residual_block_ref(x, params, norm='layer'):
    def ln(v, g, b):
        mu = jnp.mean(v, axis=(1, 2, 3), keepdims=True)
        var = jnp.mean((v - mu) ** 2, axis=(1, 2, 3), keepdims=True)
        return (v - mu) / jnp.sqrt(var + _LN_EPS) * g[None] + b[None]

    def silu(v):
        return v * jax.nn.sigmoid(v)

    def conv(v, w, b):
        y = lax.conv_general_dilated(
            v, w, (1, 1), 'SAME',
            dimension_numbers=('NCHW', 'OIHW', 'NCHW'),
            precision=lax.Precision.HIGHEST)
        return y + b[None, :, None, None]

    h1 = ln(x, params['g1'], params['be1']) if norm == 'layer' else x
    y1 = conv(silu(h1), params['w1'], params['b1'])
    h2 = ln(y1, params['g2'], params['be2']) if norm == 'layer' else y1
    y2 = conv(silu(h2), params['w2'], params['b2'])
    return y2 + x


def make_params(key, C):
    ks = jax.random.split(key, 8)
    s = 1.0 / (3.0 * float(C) ** 0.5)
    return {
        'w1': s * jax.random.normal(ks[0], (C, C, 3, 3), jnp.float32),       # Conv2d weight (OIHW)
        'b1': 0.05 * jax.random.normal(ks[1], (C,), jnp.float32),
        'w2': s * jax.random.normal(ks[2], (C, C, 3, 3), jnp.float32),
        'b2': 0.05 * jax.random.normal(ks[3], (C,), jnp.float32),
        'g1': 1.0 + 0.1 * jax.random.normal(ks[4], (C, 1, 1), jnp.float32),  # LayerNorm weight
        'be1': 0.1 * jax.random.normal(ks[5], (C, 1, 1), jnp.float32),
        'g2': 1.0 + 0.1 * jax.random.normal(ks[6], (C, 1, 1), jnp.float32),
        'be2': 0.1 * jax.random.normal(ks[7], (C, 1, 1), jnp.float32),
    }


if __name__ == "__main__":
    root = jax.random.PRNGKey(0)
    k_a, k_b, k_xa, k_xb = jax.random.split(root, 4)

    # Tolerance reflects bf16 MXU operands (f32 accumulation) in the kernel vs.
    # an f32 / HIGHEST-precision reference.
    RTOL, ATOL = 3e-2, 3e-2

    # Case A: default module config (norm='layer').  LayerNorm([C,1,1]) forces
    # a (N, C, 1, 1) input shape -> center-tap kernel.
    C_a = 32
    params_a = make_params(k_a, C_a)
    x_a = jax.random.normal(k_xa, (2, C_a, 1, 1), jnp.float32)
    out_a = jax.block_until_ready(residual_block_pallas(x_a, params_a, norm='layer'))
    ref_a = residual_block_ref(x_a, params_a, norm='layer')
    assert out_a.shape == x_a.shape and out_a.dtype == x_a.dtype
    err_a = float(jnp.max(jnp.abs(out_a - ref_a)))
    assert jnp.allclose(out_a, ref_a, rtol=RTOL, atol=ATOL), (
        f"layer-norm case mismatch, max abs err = {err_a}")

    # Case B: norm='none' (nn.Identity) at 16x16 spatial — per-ky K=3C conv path.
    C_b = 8
    params_b = make_params(k_b, C_b)
    x_b = jax.random.normal(k_xb, (2, C_b, 16, 16), jnp.float32)
    out_b = jax.block_until_ready(residual_block_pallas(x_b, params_b, norm='none'))
    ref_b = residual_block_ref(x_b, params_b, norm='none')
    assert out_b.shape == x_b.shape
    err_b = float(jnp.max(jnp.abs(out_b - ref_b)))
    assert jnp.allclose(out_b, ref_b, rtol=RTOL, atol=ATOL), (
        f"identity-norm case mismatch, max abs err = {err_b}")

    print("KERNEL_OK")
</pallas_src>

<mosaic_0001>
module attributes {stable_mosaic.version = 11 : i64} {
  func.func @_res_1x1_kernel(%arg0: i32, %arg1: memref<2x32xf32, #tpu.memory_space<vmem>>, %arg2: memref<32x32xbf16, #tpu.memory_space<vmem>>, %arg3: memref<32x32xbf16, #tpu.memory_space<vmem>>, %arg4: memref<8x32xf32, #tpu.memory_space<vmem>>, %arg5: memref<2x32xf32, #tpu.memory_space<vmem>>) attributes {dimension_semantics = [#tpu.dimension_semantics<parallel>], iteration_bounds = array<i64: 1>, scalar_prefetch = 0 : i64, scratch_operands = 0 : i64, tpu.core_type = #tpu.core_type<tc>, window_params = [{transform_indices = @transform_0, window_bounds = array<i64: 2, 32>}, {pipeline_mode = #tpu.pipeline_mode<synchronous>, transform_indices = @transform_1, window_bounds = array<i64: 32, 32>}, {pipeline_mode = #tpu.pipeline_mode<synchronous>, transform_indices = @transform_2, window_bounds = array<i64: 32, 32>}, {pipeline_mode = #tpu.pipeline_mode<synchronous>, transform_indices = @transform_3, window_bounds = array<i64: 8, 32>}, {transform_indices = @transform_4, window_bounds = array<i64: 2, 32>}]} {
    %c0 = arith.constant 0 : index
    %c0_0 = arith.constant 0 : index
    %0 = vector.load %arg1[%c0, %c0_0] : memref<2x32xf32, #tpu.memory_space<vmem>>, vector<2x32xf32>
    %c0_1 = arith.constant 0 : index
    %c0_2 = arith.constant 0 : index
    %1 = vector.load %arg4[%c0_1, %c0_2] : memref<8x32xf32, #tpu.memory_space<vmem>>, vector<1x32xf32>
    %c1 = arith.constant 1 : index
    %c0_3 = arith.constant 0 : index
    %2 = vector.load %arg4[%c1, %c0_3] : memref<8x32xf32, #tpu.memory_space<vmem>>, vector<1x32xf32>
    %c2 = arith.constant 2 : index
    %c0_4 = arith.constant 0 : index
    %3 = vector.load %arg4[%c2, %c0_4] : memref<8x32xf32, #tpu.memory_space<vmem>>, vector<1x32xf32>
    %c3 = arith.constant 3 : index
    %c0_5 = arith.constant 0 : index
    %4 = vector.load %arg4[%c3, %c0_5] : memref<8x32xf32, #tpu.memory_space<vmem>>, vector<1x32xf32>
    %c4 = arith.constant 4 : index
    %c0_6 = arith.constant 0 : index
    %5 = vector.load %arg4[%c4, %c0_6] : memref<8x32xf32, #tpu.memory_space<vmem>>, vector<1x32xf32>
    %c5 = arith.constant 5 : index
    %c0_7 = arith.constant 0 : index
    %6 = vector.load %arg4[%c5, %c0_7] : memref<8x32xf32, #tpu.memory_space<vmem>>, vector<1x32xf32>
    %cst = arith.constant dense<0.000000e+00> : vector<2xf32>
    %7 = vector.multi_reduction <add>, %0, %cst [1] : vector<2x32xf32> to vector<2xf32>
    %8 = vector.shape_cast %7 : vector<2xf32> to vector<2x1xf32>
    %cst_8 = arith.constant 3.200000e+01 : f32
    %9 = vector.broadcast %cst_8 : f32 to vector<2x1xf32>
    %10 = arith.divf %8, %9 : vector<2x1xf32>
    %11 = vector.broadcast %10 : vector<2x1xf32> to vector<2x32xf32>
    %12 = arith.subf %0, %11 : vector<2x32xf32>
    %13 = arith.mulf %12, %12 : vector<2x32xf32>
    %cst_9 = arith.constant dense<0.000000e+00> : vector<2xf32>
    %14 = vector.multi_reduction <add>, %13, %cst_9 [1] : vector<2x32xf32> to vector<2xf32>
    %15 = vector.shape_cast %14 : vector<2xf32> to vector<2x1xf32>
    %cst_10 = arith.constant 3.200000e+01 : f32
    %16 = vector.broadcast %cst_10 : f32 to vector<2x1xf32>
    %17 = arith.divf %15, %16 : vector<2x1xf32>
    %18 = vector.broadcast %10 : vector<2x1xf32> to vector<2x32xf32>
    %19 = arith.subf %0, %18 : vector<2x32xf32>
    %cst_11 = arith.constant 9.99999974E-6 : f32
    %20 = vector.broadcast %cst_11 : f32 to vector<2x1xf32>
    %21 = arith.addf %17, %20 : vector<2x1xf32>
    %22 = math.rsqrt %21 : vector<2x1xf32>
    %23 = vector.broadcast %22 : vector<2x1xf32> to vector<2x32xf32>
    %24 = arith.mulf %19, %23 : vector<2x32xf32>
    %25 = vector.broadcast %3 : vector<1x32xf32> to vector<2x32xf32>
    %26 = arith.mulf %24, %25 : vector<2x32xf32>
    %27 = vector.broadcast %4 : vector<1x32xf32> to vector<2x32xf32>
    %28 = arith.addf %26, %27 : vector<2x32xf32>
    %29 = arith.negf %28 : vector<2x32xf32>
    %30 = math.exp %29 : vector<2x32xf32>
    %cst_12 = arith.constant 1.000000e+00 : f32
    %31 = vector.broadcast %cst_12 : f32 to vector<2x32xf32>
    %32 = arith.addf %31, %30 : vector<2x32xf32>
    %33 = arith.divf %31, %32 : vector<2x32xf32>
    %34 = arith.mulf %28, %33 : vector<2x32xf32>
    %35 = arith.truncf %34 : vector<2x32xf32> to vector<2x32xbf16>
    %c0_13 = arith.constant 0 : index
    %c0_14 = arith.constant 0 : index
    %36 = vector.load %arg2[%c0_13, %c0_14] : memref<32x32xbf16, #tpu.memory_space<vmem>>, vector<32x32xbf16>
    %cst_15 = arith.constant dense<0.000000e+00> : vector<2x32xf32>
    %37 = tpu.matmul %35, %36, %cst_15 {dimension_numbers = #tpu.dot_dimension_numbers<[1], [0], [0], [1], [0, 0, 1, 1], [], []>} : vector<2x32xbf16>, vector<32x32xbf16>, vector<2x32xf32> -> vector<2x32xf32>
    %38 = vector.broadcast %1 : vector<1x32xf32> to vector<2x32xf32>
    %39 = arith.addf %37, %38 : vector<2x32xf32>
    %cst_16 = arith.constant dense<0.000000e+00> : vector<2xf32>
    %40 = vector.multi_reduction <add>, %39, %cst_16 [1] : vector<2x32xf32> to vector<2xf32>
    %41 = vector.shape_cast %40 : vector<2xf32> to vector<2x1xf32>
    %cst_17 = arith.constant 3.200000e+01 : f32
    %42 = vector.broadcast %cst_17 : f32 to vector<2x1xf32>
    %43 = arith.divf %41, %42 : vector<2x1xf32>
    %44 = vector.broadcast %43 : vector<2x1xf32> to vector<2x32xf32>
    %45 = arith.subf %39, %44 : vector<2x32xf32>
    %46 = arith.mulf %45, %45 : vector<2x32xf32>
    %cst_18 = arith.constant dense<0.000000e+00> : vector<2xf32>
    %47 = vector.multi_reduction <add>, %46, %cst_18 [1] : vector<2x32xf32> to vector<2xf32>
    %48 = vector.shape_cast %47 : vector<2xf32> to vector<2x1xf32>
    %cst_19 = arith.constant 3.200000e+01 : f32
    %49 = vector.broadcast %cst_19 : f32 to vector<2x1xf32>
    %50 = arith.divf %48, %49 : vector<2x1xf32>
    %51 = vector.broadcast %43 : vector<2x1xf32> to vector<2x32xf32>
    %52 = arith.subf %39, %51 : vector<2x32xf32>
    %cst_20 = arith.constant 9.99999974E-6 : f32
    %53 = vector.broadcast %cst_20 : f32 to vector<2x1xf32>
    %54 = arith.addf %50, %53 : vector<2x1xf32>
    %55 = math.rsqrt %54 : vector<2x1xf32>
    %56 = vector.broadcast %55 : vector<2x1xf32> to vector<2x32xf32>
    %57 = arith.mulf %52, %56 : vector<2x32xf32>
    %58 = vector.broadcast %5 : vector<1x32xf32> to vector<2x32xf32>
    %59 = arith.mulf %57, %58 : vector<2x32xf32>
    %60 = vector.broadcast %6 : vector<1x32xf32> to vector<2x32xf32>
    %61 = arith.addf %59, %60 : vector<2x32xf32>
    %62 = arith.negf %61 : vector<2x32xf32>
    %63 = math.exp %62 : vector<2x32xf32>
    %cst_21 = arith.constant 1.000000e+00 : f32
    %64 = vector.broadcast %cst_21 : f32 to vector<2x32xf32>
    %65 = arith.addf %64, %63 : vector<2x32xf32>
    %66 = arith.divf %64, %65 : vector<2x32xf32>
    %67 = arith.mulf %61, %66 : vector<2x32xf32>
    %68 = arith.truncf %67 : vector<2x32xf32> to vector<2x32xbf16>
    %c0_22 = arith.constant 0 : index
    %c0_23 = arith.constant 0 : index
    %69 = vector.load %arg3[%c0_22, %c0_23] : memref<32x32xbf16, #tpu.memory_space<vmem>>, vector<32x32xbf16>
    %cst_24 = arith.constant dense<0.000000e+00> : vector<2x32xf32>
    %70 = tpu.matmul %68, %69, %cst_24 {dimension_numbers = #tpu.dot_dimension_numbers<[1], [0], [0], [1], [0, 0, 1, 1], [], []>} : vector<2x32xbf16>, vector<32x32xbf16>, vector<2x32xf32> -> vector<2x32xf32>
    %71 = vector.broadcast %2 : vector<1x32xf32> to vector<2x32xf32>
    %72 = arith.addf %70, %71 : vector<2x32xf32>
    %73 = arith.addf %72, %0 : vector<2x32xf32>
    %c0_25 = arith.constant 0 : index
    %c0_26 = arith.constant 0 : index
    %74 = vector.load %arg5[%c0_25, %c0_26] : memref<2x32xf32, #tpu.memory_space<vmem>>, vector<2x32xf32>
    tpu.vector_store %arg5[%c0_25, %c0_26], %73 {strides = array<i32>} : memref<2x32xf32, #tpu.memory_space<vmem>>, vector<2x32xf32>,
    return
  }
  func.func @transform_0(%arg0: i32) -> (i32, i32) {
    %c0_i32 = arith.constant 0 : i32
    %c0_i32_0 = arith.constant 0 : i32
    return %arg0, %c0_i32 : i32, i32
  }
  func.func @transform_1(%arg0: i32) -> (i32, i32) {
    %c0_i32 = arith.constant 0 : i32
    %c0_i32_0 = arith.constant 0 : i32
    %c0_i32_1 = arith.constant 0 : i32
    return %c0_i32, %c0_i32_0 : i32, i32
  }
  func.func @transform_2(%arg0: i32) -> (i32, i32) {
    %c0_i32 = arith.constant 0 : i32
    %c0_i32_0 = arith.constant 0 : i32
    %c0_i32_1 = arith.constant 0 : i32
    return %c0_i32, %c0_i32_0 : i32, i32
  }
  func.func @transform_3(%arg0: i32) -> (i32, i32) {
    %c0_i32 = arith.constant 0 : i32
    %c0_i32_0 = arith.constant 0 : i32
    %c0_i32_1 = arith.constant 0 : i32
    return %c0_i32, %c0_i32_0 : i32, i32
  }
  func.func @transform_4(%arg0: i32) -> (i32, i32) {
    %c0_i32 = arith.constant 0 : i32
    %c0_i32_0 = arith.constant 0 : i32
    return %arg0, %c0_i32 : i32, i32
  }
}

</mosaic_0001>

<llo_original>
// kernel: tpu_custom_call.1
$region0: #{tpu_custom_call.1}
  #allocation0 [shape = 'u32[]', space=smem, size = 0x4, offset = 0x4, fixed_abs, tag = 'smem constant byte address 0x4 - core index']
  #allocation1 [shape = 'u32[144,128]{1,0:T(1,128)}', space=vmem, size = 0x12000, scoped, tag = 'internal scratch']
  %s0 = inlined_call_operand.hbm [shape: f32[2,32], index: 0, kind: input, shape index: {}]
  %s1 = inlined_call_operand.hbm [shape: bf16[32,32], index: 1, kind: input, shape index: {}]
  %s2 = inlined_call_operand.hbm [shape: bf16[32,32], index: 2, kind: input, shape index: {}]
  %s3 = inlined_call_operand.hbm [shape: f32[8,32], index: 3, kind: input, shape index: {}]
  %s4 = inlined_call_operand.hbm [shape: f32[2,32], index: 4, kind: output, shape index: {}]
  %s5 = sld [smem:[#allocation0]]
  $region42: #{tpu_custom_call.1} parent=0
    _
  %s7 = ssub.s32 1, %s5
  %s8 = scalar_select 0, %s7, %s5
  $region1: #{tpu_custom_call.1} parent=0
    #allocation2 [shape = 'u8[1024]{0}', space=vmem, size = 0x400, scoped, tag = 'input window, operand 0, single buffered']
    #allocation3 [shape = 's32[1]{0}', space=sflag, size = 0x4, scoped, tag = 'scoped memory for tpu_custom_call.1']
    #allocation4 [shape = 's32[1]{0}', space=sflag, size = 0x4, scoped, tag = 'scoped memory for tpu_custom_call.1']
    #allocation5 [shape = 'u8[8192]{0}', space=vmem, size = 0x2000, scoped, tag = 'input window, operand 1, single buffered']
    #allocation6 [shape = 's32[1]{0}', space=sflag, size = 0x4, scoped, tag = 'scoped memory for tpu_custom_call.1']
    #allocation7 [shape = 'u8[8192]{0}', space=vmem, size = 0x2000, scoped, tag = 'input window, operand 2, single buffered']
    #allocation8 [shape = 'u8[4096]{0}', space=vmem, size = 0x1000, scoped, tag = 'input window, operand 3, single buffered']
    #allocation9 [shape = 's32[1]{0}', space=sflag, size = 0x4, scoped, tag = 'scoped memory for tpu_custom_call.1']
    #allocation10 [shape = 'u8[1024]{0}', space=vmem, size = 0x400, scoped, tag = 'output window, operand 0, single buffered']
    %9 = vsyncpa [#allocation3], 0
    %10 = vsyncpa [#allocation6], 0
    %11 = vsyncpa [#allocation9], 0
    %12 = vsyncpa [#allocation4], 0
    // Predicated region
    $region2: #{tpu_custom_call.1} parent=1 // pred_check
      _
    $region3: #{tpu_custom_call.1} parent=1 // pred_check_branch
      %14 = sbr.rel (0) target = $region5
    $region4: #{tpu_custom_call.1} parent=1 // pred_region
      %s16 = ssub.s32 32, 32
      %17 = vsyncadd [#allocation3], %s16
      %s19 = sshll.u32 [#allocation2], 4
      %s20 = int_to_ptr.vmem [resolvable:$true] %s19
      %22 = dma.hbm_to_vmem [thread:$0]  %s0, 32, %s20, [#allocation3]
    $region5: #{tpu_custom_call.1} parent=1 // pred_fallthru
      _
    // Predicated region
    $region6: #{tpu_custom_call.1} parent=1 // pred_check
      _
    $region7: #{tpu_custom_call.1} parent=1 // pred_check_branch
      %24 = sbr.rel (0) target = $region9
    $region8: #{tpu_custom_call.1} parent=1 // pred_region
      %s26 = ssub.s32 256, 256
      %27 = vsyncadd [#allocation6], %s26
      %s28 = sshll.u32 [#allocation5], 4
      %s29 = int_to_ptr.vmem [resolvable:$true] %s28
      %34 = dma.hbm_to_vmem [thread:$0]  %s1, 256, %s29, [#allocation6], 64, 64, 4
    $region9: #{tpu_custom_call.1} parent=1 // pred_fallthru
      _
    // Predicated region
    $region10: #{tpu_custom_call.1} parent=1 // pred_check
      _
    $region11: #{tpu_custom_call.1} parent=1 // pred_check_branch
      %36 = sbr.rel (0) target = $region13
    $region12: #{tpu_custom_call.1} parent=1 // pred_region
      %s38 = ssub.s32 256, 256
      %39 = vsyncadd [#allocation6], %s38
      %s40 = sshll.u32 [#allocation7], 4
      %s41 = int_to_ptr.vmem [resolvable:$true] %s40
      %46 = dma.hbm_to_vmem [thread:$0]  %s2, 256, %s41, [#allocation6], 64, 64, 4
    $region13: #{tpu_custom_call.1} parent=1 // pred_fallthru
      _
    // Predicated region
    $region14: #{tpu_custom_call.1} parent=1 // pred_check
      _
    $region15: #{tpu_custom_call.1} parent=1 // pred_check_branch
      %48 = sbr.rel (0) target = $region17
    $region16: #{tpu_custom_call.1} parent=1 // pred_region
      %s50 = ssub.s32 128, 128
      %51 = vsyncadd [#allocation9], %s50
      %s53 = sshll.u32 [#allocation8], 4
      %s54 = int_to_ptr.vmem [resolvable:$true] %s53
      %56 = dma.hbm_to_vmem [thread:$0]  %s3, 128, %s54, [#allocation9]
    $region17: #{tpu_custom_call.1} parent=1 // pred_fallthru
      _
    // Predicated region
    $region18: #{tpu_custom_call.1} parent=1 // pred_check
      _
    $region19: #{tpu_custom_call.1} parent=1 // pred_check_branch
      %58 = sbr.rel (0) target = $region21
    $region20: #{tpu_custom_call.1} parent=1 // pred_region
      %59 = dma.done [#allocation3], 32
    $region21: #{tpu_custom_call.1} parent=1 // pred_fallthru
      _
    // Predicated region
    $region22: #{tpu_custom_call.1} parent=1 // pred_check
      _
    $region23: #{tpu_custom_call.1} parent=1 // pred_check_branch
      %61 = sbr.rel (0) target = $region25
    $region24: #{tpu_custom_call.1} parent=1 // pred_region
      %62 = dma.done [#allocation6], 256
    $region25: #{tpu_custom_call.1} parent=1 // pred_fallthru
      _
    // Predicated region
    $region26: #{tpu_custom_call.1} parent=1 // pred_check
      _
    $region27: #{tpu_custom_call.1} parent=1 // pred_check_branch
      %64 = sbr.rel (0) target = $region29
    $region28: #{tpu_custom_call.1} parent=1 // pred_region
      %65 = dma.done [#allocation6], 256
    $region29: #{tpu_custom_call.1} parent=1 // pred_fallthru
      _
    // Predicated region
    $region30: #{tpu_custom_call.1} parent=1 // pred_check
      _
    $region31: #{tpu_custom_call.1} parent=1 // pred_check_branch
      %67 = sbr.rel (0) target = $region33
    $region32: #{tpu_custom_call.1} parent=1 // pred_region
      %68 = dma.done [#allocation9], 128
    $region33: #{tpu_custom_call.1} parent=1 // pred_fallthru
      _
    %v70 = vld [vmem:[#allocation2] sm:$0x3]
    %v71 = vld [vmem:[#allocation8] sm:$0x1]
    %v72 = vld [vmem:[#allocation8 + $0x1] sm:$0x1]
    %v73 = vld [vmem:[#allocation8 + $0x2] sm:$0x1]
    %v74 = vld [vmem:[#allocation8 + $0x3] sm:$0x1]
    %v75 = vld [vmem:[#allocation8 + $0x4] sm:$0x1]
    %v76 = vld [vmem:[#allocation8 + $0x5] sm:$0x1]
    %vm77 = vcmask 254976
    %v78 = vsel %vm77, %v70, 0.0
    %79 = vadd.xlane.f32.xlu0 %v78
    %v80 = vpop.xlane.xlu0 %79
    %v81 = vrcp.pop 32.0
    %v82 = vmul.f32 %v80, %v81
    %v83 = vsub.f32 %v70, %v82
    %v84 = vmul.f32 %v83, %v83
    %v85 = vsel %vm77, %v84, 0.0
    %86 = vadd.xlane.f32.xlu0 %v85
    %v87 = vpop.xlane.xlu0 %86
    %v88 = vmul.f32 %v87, %v81
    %v89 = vadd.f32 %v88, 1e-05
    %v90 = vrsqrt.pop %v89
    %v91 = vmul.f32 %v83, %v90
    %v92 = vlaneseq
    %v93 = vshrl.u32 %v92, 7
    %v94 = vsub.s32 0, %v93
    %v95 = vrot.slane %v73, %v94
    %v96 = vmul.f32 %v91, %v95
    %v97 = vlaneseq
    %v98 = vshrl.u32 %v97, 7
    %v99 = vsub.s32 0, %v98
    %v100 = vrot.slane %v74, %v99
    %v101 = vadd.f32 %v96, %v100
    %v102 = vxor.u32 %v101, 2147483648
    %v103 = vmul.f32 %v102, 1.442695
    %v104 = vpow.pop %v103
    %v105 = vadd.f32 %v104, 1.0
    %v106 = vrcp.pop %v105
    %v107 = vmul.f32 1.0, %v106
    %v108 = vmul.f32 %v101, %v107
    %v109 = vpack.c.bf16 %v108, %v108
    %v110 = vld [vmem:[#allocation5] sm:$0xf]
    %v111 = vld [vmem:[#allocation5 + $0x4] sm:$0xf]
    %v112 = vld [vmem:[#allocation5 + $0x8] sm:$0xf]
    %v113 = vld [vmem:[#allocation5 + $0xc] sm:$0xf]
    %v114 = vlaneseq
    %v115 = vshrl.u32 %v114, 7
    %v116 = vsub.s32 0, %v115
    %v117 = vrot.slane %v71, %v116
    %v122 = vunpack.c.l.b16 %v110
    %v123 = vunpack.c.l.b16 %v111
    %v124 = vunpack.c.l.b16 %v112
    %v125 = vunpack.c.l.b16 %v113
    %v126 = vpack.c.b16 %v123, %v122
    %v127 = vpack.c.b16 %v125, %v124
    %vm130 = vcmask 261120
    %v132 = vsel %vm130, %v109, 0
    %134 = vmatprep.subr.bf16.mxu0 0
    %135 = vmatpush1.bf16.msra.mxu0 %v126
    %136 = vmatprep.subr.bf16.mxu0 0
    %137 = vmatpush1.bf16.msra.mxu0 %v127
    %138 = vmatprep.subr.bf16.mxu0 0
    %139 = vmatpush1.bf16.msra.mxu0 0
    %140 = vmatprep.subr.bf16.mxu0 0
    %141 = vmatpush1.bf16.msra.mxu0 0
    %142 = vmatprep.subr.bf16.mxu0 0
    %143 = vmatpush1.bf16.msra.mxu0 0
    %144 = vmatprep.subr.bf16.mxu0 0
    %145 = vmatpush1.bf16.msra.mxu0 0
    %146 = vmatprep.subr.bf16.mxu0 0
    %147 = vmatpush1.bf16.msra.mxu0 0
    %148 = vmatprep.subr.bf16.mxu0 0
    %149 = vmatpush1.bf16.msra.mxu0 0
    %150 = vmatprep.subr.bf16.mxu0 0
    %151 = vmatpush1.bf16.msra.mxu0 0
    %152 = vmatprep.subr.bf16.mxu0 0
    %153 = vmatpush1.bf16.msra.mxu0 0
    %154 = vmatprep.subr.bf16.mxu0 0
    %155 = vmatpush1.bf16.msra.mxu0 0
    %156 = vmatprep.subr.bf16.mxu0 0
    %157 = vmatpush1.bf16.msra.mxu0 0
    %158 = vmatprep.subr.bf16.mxu0 0
    %159 = vmatpush1.bf16.msra.mxu0 0
    %160 = vmatprep.subr.bf16.mxu0 0
    %161 = vmatpush1.bf16.msra.mxu0 0
    %162 = vmatprep.subr.bf16.mxu0 0
    %163 = vmatpush1.bf16.msra.mxu0 0
    %164 = vmatprep.subr.bf16.mxu0 0
    %165 = vmatpush1.bf16.msra.mxu0 0
    %166 = vmatprep.mubr.bf16.mxu0 0
    %167 = vmatmul.mubr.bf16.gmra.mrb[0].mxu0 %v132
    %v168 = vpop.f32.mrb[0].mxu0
    %v169 = vadd.f32 %v117, %v168
    %v170 = vpop.f32.mrb[0].mxu0
    %v171 = vpop.f32.mrb[0].mxu0
    %v172 = vpop.f32.mrb[0].mxu0
    %173 = vdwg.mxu0
    %v174 = vsel %vm77, %v169, 0.0
    %175 = vadd.xlane.f32.xlu0 %v174
    %v176 = vpop.xlane.xlu0 %175
    %v177 = vmul.f32 %v176, %v81
    %v178 = vsub.f32 %v169, %v177
    %v179 = vmul.f32 %v178, %v178
    %v180 = vsel %vm77, %v179, 0.0
    %181 = vadd.xlane.f32.xlu0 %v180
    %v182 = vpop.xlane.xlu0 %181
    %v183 = vmul.f32 %v182, %v81
    %v184 = vadd.f32 %v183, 1e-05
    %v185 = vrsqrt.pop %v184
    %v186 = vmul.f32 %v178, %v185
    %v187 = vlaneseq
    %v188 = vshrl.u32 %v187, 7
    %v189 = vsub.s32 0, %v188
    %v190 = vrot.slane %v75, %v189
    %v191 = vmul.f32 %v186, %v190
    %v192 = vlaneseq
    %v193 = vshrl.u32 %v192, 7
    %v194 = vsub.s32 0, %v193
    %v195 = vrot.slane %v76, %v194
    %v196 = vadd.f32 %v191, %v195
    %v197 = vxor.u32 %v196, 2147483648
    %v198 = vmul.f32 %v197, 1.442695
    %v199 = vpow.pop %v198
    %v200 = vadd.f32 %v199, 1.0
    %v201 = vrcp.pop %v200
    %v202 = vmul.f32 1.0, %v201
    %v203 = vmul.f32 %v196, %v202
    %v204 = vpack.c.bf16 %v203, %v203
    %v205 = vld [vmem:[#allocation7] sm:$0xf]
    %v206 = vld [vmem:[#allocation7 + $0x4] sm:$0xf]
    %v207 = vld [vmem:[#allocation7 + $0x8] sm:$0xf]
    %v208 = vld [vmem:[#allocation7 + $0xc] sm:$0xf]
    %v209 = vlaneseq
    %v210 = vshrl.u32 %v209, 7
    %v211 = vsub.s32 0, %v210
    %v212 = vrot.slane %v72, %v211
    %v217 = vunpack.c.l.b16 %v205
    %v218 = vunpack.c.l.b16 %v206
    %v219 = vunpack.c.l.b16 %v207
    %v220 = vunpack.c.l.b16 %v208
    %v221 = vpack.c.b16 %v218, %v217
    %v222 = vpack.c.b16 %v220, %v219
    %v226 = vsel %vm130, %v204, 0
    %228 = vmatprep.subr.bf16.mxu0 0
    %229 = vmatpush1.bf16.msra.mxu0 %v221
    %230 = vmatprep.subr.bf16.mxu0 0
    %231 = vmatpush1.bf16.msra.mxu0 %v222
    %232 = vmatprep.subr.bf16.mxu0 0
    %233 = vmatpush1.bf16.msra.mxu0 0
    %234 = vmatprep.subr.bf16.mxu0 0
    %235 = vmatpush1.bf16.msra.mxu0 0
    %236 = vmatprep.subr.bf16.mxu0 0
    %237 = vmatpush1.bf16.msra.mxu0 0
    %238 = vmatprep.subr.bf16.mxu0 0
    %239 = vmatpush1.bf16.msra.mxu0 0
    %240 = vmatprep.subr.bf16.mxu0 0
    %241 = vmatpush1.bf16.msra.mxu0 0
    %242 = vmatprep.subr.bf16.mxu0 0
    %243 = vmatpush1.bf16.msra.mxu0 0
    %244 = vmatprep.subr.bf16.mxu0 0
    %245 = vmatpush1.bf16.msra.mxu0 0
    %246 = vmatprep.subr.bf16.mxu0 0
    %247 = vmatpush1.bf16.msra.mxu0 0
    %248 = vmatprep.subr.bf16.mxu0 0
    %249 = vmatpush1.bf16.msra.mxu0 0
    %250 = vmatprep.subr.bf16.mxu0 0
    %251 = vmatpush1.bf16.msra.mxu0 0
    %252 = vmatprep.subr.bf16.mxu0 0
    %253 = vmatpush1.bf16.msra.mxu0 0
    %254 = vmatprep.subr.bf16.mxu0 0
    %255 = vmatpush1.bf16.msra.mxu0 0
    %256 = vmatprep.subr.bf16.mxu0 0
    %257 = vmatpush1.bf16.msra.mxu0 0
    %258 = vmatprep.subr.bf16.mxu0 0
    %259 = vmatpush1.bf16.msra.mxu0 0
    %260 = vmatprep.mubr.bf16.mxu0 0
    %261 = vmatmul.mubr.bf16.gmra.mrb[0].mxu0 %v226
    %v262 = vpop.f32.mrb[0].mxu0
    %v263 = vadd.f32 %v212, %v262
    %v264 = vpop.f32.mrb[0].mxu0
    %v265 = vpop.f32.mrb[0].mxu0
    %v266 = vpop.f32.mrb[0].mxu0
    %267 = vdwg.mxu0
    %v268 = vadd.f32 %v263, %v70
    %269 = vst.msk [vmem:[#allocation10] sm:$0x3] %vm77, %v268
    // Predicated region
    $region34: #{tpu_custom_call.1} parent=1 // pred_check
      _
    $region35: #{tpu_custom_call.1} parent=1 // pred_check_branch
      %271 = sbr.rel (0) target = $region37
    $region36: #{tpu_custom_call.1} parent=1 // pred_region
      %s273 = ssub.s32 32, 32
      %274 = vsyncadd [#allocation4], %s273
      %s276 = sshll.u32 [#allocation10], 4
      %s277 = int_to_ptr.vmem [resolvable:$true] %s276
      %279 = dma.vmem_to_hbm [thread:$0]  %s277, 32, %s4, [#allocation4]
    $region37: #{tpu_custom_call.1} parent=1 // pred_fallthru
      _
    // Predicated region
    $region38: #{tpu_custom_call.1} parent=1 // pred_check
      _
    $region39: #{tpu_custom_call.1} parent=1 // pred_check_branch
      %281 = sbr.rel (0) target = $region41
    $region40: #{tpu_custom_call.1} parent=1 // pred_region
      %282 = dma.done [#allocation4], 32
    $region41: #{tpu_custom_call.1} parent=1 // pred_fallthru
      _
    %283 = vsyncpa [#allocation3], 1
    %284 = vsyncpa [#allocation6], 1
    %285 = vsyncpa [#allocation9], 1
    %286 = vsyncpa [#allocation4], 1

</llo_original>
